<compile_context>
chip_gen: v5e
topology: v5e:2x2
jax: 0.10.0
libtpu: 0.0.40
codegen_flags: <defaults>
</compile_context>

<pallas_src>
import functools

import jax
import jax.numpy as jnp
from jax import lax
from jax.experimental import pallas as pl
from jax.experimental.pallas import tpu as pltpu

KW = 4                       # conv kernel size used by NLayerDiscriminator
PADW = 2                     # int(ceil((4 - 1) / 2))
LRELU_SLOPE = 0.2
BN_EPS = 1e-5
LANE = 128                   # TPU lane width; Cout dims padded to a multiple of this
TM_TARGET = 128              # output rows (flattened) per in-kernel matmul block


def _round_lane(c):
    return ((c + LANE - 1) // LANE) * LANE


def _vmem_limit_bytes():
    """Per-generation VMEM budget (v5e/v6e: 128 MiB physical, v7x: 64 MiB)."""
    try:
        cap = int(getattr(pltpu.get_tpu_info(), "vmem_capacity_bytes", 128 << 20))
    except Exception:
        cap = 64 << 20
    return int(max(16 << 20, min(cap * 5 // 8, 96 << 20)))


VMEM_LIMIT = _vmem_limit_bytes()


# ----------------------------------------------------------------------------
# Pallas kernels
# ----------------------------------------------------------------------------
def _conv_kernel(x_ref, w_ref, b_ref, o_ref, *stat_refs,
                 keh, wo, tm, n_blocks, mo, leaky, with_stats):
    """Direct conv on a flattened spatial plane for one (batch item, Cout-block) tile.

    x_ref: (Mx, K)        bf16 flattened (row-major (h, w)) width-folded input plane
    w_ref: (keh, K, TCo)  bf16 folded weights
    b_ref: (1, TCo)       f32 bias
    o_ref: (Mo, TCo)      f32 conv output (optionally with fused LeakyReLU)
    stat_refs (optional): two (1, TCo) f32 refs -- per-channel sum and sum-of-squares.
    """
    tco = o_ref.shape[-1]
    bias = b_ref[...]                                    # hoisted out of the block loop

    def block_fn(bi, carry):
        s_sum, s_sq = carry
        # Clamp the last block so the (static-size) slice stays in range; rows that were
        # already produced by the previous block are recomputed (idempotent) and masked
        # out of the BN statistics below.
        start = jnp.minimum(bi * tm, mo - tm)
        acc = jnp.zeros((tm, tco), jnp.float32)
        for dh in range(keh):                            # keh fat matmuls per block
            lhs = x_ref[pl.ds(start + dh * wo, tm), :]
            acc = acc + jnp.dot(lhs, w_ref[dh], preferred_element_type=jnp.float32)
        acc = acc + bias
        if with_stats:
            thresh = bi * tm - start                     # > 0 only on a clamped last block
            rows = lax.broadcasted_iota(jnp.int32, (tm, tco), 0)
            contrib = jnp.where(rows >= thresh, acc, 0.0)
            s_sum = s_sum + jnp.sum(contrib, axis=0, keepdims=True)
            s_sq = s_sq + jnp.sum(contrib * contrib, axis=0, keepdims=True)
        if leaky:
            acc = jnp.maximum(acc, LRELU_SLOPE * acc)
        o_ref[pl.ds(start, tm), :] = acc
        return (s_sum, s_sq)

    init = (jnp.zeros((1, tco), jnp.float32), jnp.zeros((1, tco), jnp.float32))
    s_sum, s_sq = lax.fori_loop(0, n_blocks, block_fn, init)
    if with_stats:
        stat_refs[0][...] = s_sum
        stat_refs[1][...] = s_sq


def _affine_lrelu_kernel(x_ref, s_ref, t_ref, o_ref):
    """y = LeakyReLU(scale * x + shift) -- BatchNorm folded into a per-channel affine."""
    y = x_ref[...] * s_ref[...] + t_ref[...]
    o_ref[...] = jnp.maximum(y, LRELU_SLOPE * y)


def _pool_kernel(xs_ref, r_ref, o_ref, *, ho, wo):
    """AvgPool2d(3, stride=2, pad=1, count_include_pad=False) on a space-to-depth plane.

    xs_ref: (Hs*4, Ws, C)  s2d of the zero-padded input; row index = h_block*4 + phase
    r_ref : (ho, wo, C)    reciprocal of the valid-element count, replicated along C
    o_ref : (ho, wo, C)
    """
    c = o_ref.shape[-1]
    taps = ((0, 0), (0, 1), (1, 0))                      # (s2d block offset, phase)

    def row_fn(i, carry):
        acc = jnp.zeros((wo, c), jnp.float32)
        for ra, a in taps:
            for cb, b2 in taps:
                plane = xs_ref[(i + ra) * 4 + a * 2 + b2]      # (Ws, C)
                acc = acc + plane[cb:cb + wo, :]
        o_ref[i] = acc * r_ref[i]
        return carry

    lax.fori_loop(0, ho, row_fn, 0)


# ----------------------------------------------------------------------------
# XLA-side layout helpers (cheap, fused inside the jitted wrappers)
# ----------------------------------------------------------------------------
def _space_to_depth(x):
    """(N, H, W, C) -> (N, ceil(H/2), ceil(W/2), 4C)."""
    n, h, w, c = x.shape
    h2, w2 = h + h % 2, w + w % 2
    if (h2, w2) != (h, w):
        x = jnp.pad(x, ((0, 0), (0, h2 - h), (0, w2 - w), (0, 0)))
    hs, ws = h2 // 2, w2 // 2
    x = x.reshape(n, hs, 2, ws, 2, c).transpose(0, 1, 3, 2, 4, 5)
    return x.reshape(n, hs, ws, 4 * c)


def _regroup_weights_s2(w):
    """(4, 4, Cin, Cout) conv weights -> (2, 2, 4*Cin, Cout) matching space-to-depth order."""
    kh, kw, cin, cout = w.shape
    w = w.reshape(2, 2, 2, 2, cin, cout).transpose(0, 2, 1, 3, 4, 5)
    return w.reshape(2, 2, 4 * cin, cout)


# ----------------------------------------------------------------------------
# Pallas-backed ops
# ----------------------------------------------------------------------------
@functools.partial(jax.jit, static_argnums=(3, 4, 5))
def conv2d(x, w, b, stride, leaky, with_stats):
    """x: (N,H,W,Cin), w: (4,4,Cin,Cop), b: (Cop,) -> (N,Ho,Wo,Cop) [+ BN sums].  k=4, p=2."""
    n, h, wd, _ = x.shape
    coutp = w.shape[-1]
    ho = (h + 2 * PADW - KW) // stride + 1
    wo = (wd + 2 * PADW - KW) // stride + 1

    xb = x.astype(jnp.bfloat16)
    xp = jnp.pad(xb, ((0, 0), (PADW, PADW), (PADW, PADW), (0, 0)))
    if stride == 2:
        xe = _space_to_depth(xp)                         # stride-2 conv -> stride-1 2x2 conv
        we = _regroup_weights_s2(w)
        keh = kew = 2
    else:
        xe, we = xp, w
        keh = kew = KW
    cine = xe.shape[-1]
    k_dim = kew * cine

    # Fold the kw taps into the contraction and flatten (h, w) -> one row axis so the kernel
    # can take contiguous (TM, K) slices for any output-row block.
    xwf = jnp.concatenate([xe[:, :, d:d + wo, :] for d in range(kew)], axis=-1)
    hs = xwf.shape[1]
    mx = hs * wo
    xflat = xwf.reshape(n, mx, k_dim)
    wf = we.reshape(keh, k_dim, coutp).astype(jnp.bfloat16)

    mo = ho * wo
    tm = min(TM_TARGET, mo)
    n_blocks = pl.cdiv(mo, tm)
    tco = 256 if coutp % 256 == 0 else 128               # 256-wide N tile on v6e/v7x MXUs
    n_co = coutp // tco

    out_shapes = [jax.ShapeDtypeStruct((n, mo, coutp), jnp.float32)]
    out_specs = [pl.BlockSpec((None, mo, tco), lambda i, j: (i, 0, j))]
    if with_stats:
        out_shapes += [jax.ShapeDtypeStruct((n, 1, coutp), jnp.float32)] * 2
        out_specs += [pl.BlockSpec((None, 1, tco), lambda i, j: (i, 0, j))] * 2

    res = pl.pallas_call(
        functools.partial(_conv_kernel, keh=keh, wo=wo, tm=tm, n_blocks=n_blocks,
                          mo=mo, leaky=leaky, with_stats=with_stats),
        out_shape=tuple(out_shapes),
        grid=(n, n_co),
        in_specs=[
            pl.BlockSpec((None, mx, k_dim), lambda i, j: (i, 0, 0)),
            pl.BlockSpec((keh, k_dim, tco), lambda i, j: (0, 0, j)),
            pl.BlockSpec((1, tco), lambda i, j: (0, j)),
        ],
        out_specs=tuple(out_specs),
        compiler_params=pltpu.CompilerParams(
            dimension_semantics=("parallel", "parallel"),
            vmem_limit_bytes=VMEM_LIMIT),
    )(xflat, wf, b.reshape(1, coutp))

    out = res[0].reshape(n, ho, wo, coutp)
    if with_stats:
        return out, res[1], res[2]
    return out


@functools.partial(jax.jit, static_argnums=(5,))
def bn_affine_lrelu(y, ssum, ssq, gamma, beta, count):
    """Fold batch statistics (accumulated in the conv kernel) into a per-channel affine and
    apply affine + LeakyReLU(0.2) with a tiled Pallas kernel (f32 everywhere)."""
    n, h, w, c = y.shape
    s = jnp.sum(ssum, axis=0).reshape(1, c)
    q = jnp.sum(ssq, axis=0).reshape(1, c)
    mean = s / count
    var = q / count - mean * mean                        # biased variance (PyTorch BN forward)
    scale = gamma.reshape(1, c) * lax.rsqrt(var + BN_EPS)
    shift = beta.reshape(1, c) - mean * scale

    p = n * h * w
    y2 = y.reshape(p, c)
    tr = min(2048, max(8, (2 * 1024 * 1024) // (4 * c)))
    if p <= tr:
        tr = p                                           # full-dim block: no ragged edge
    z2 = pl.pallas_call(
        _affine_lrelu_kernel,
        out_shape=jax.ShapeDtypeStruct((p, c), jnp.float32),
        grid=(pl.cdiv(p, tr),),
        in_specs=[pl.BlockSpec((tr, c), lambda r: (r, 0)),
                  pl.BlockSpec((1, c), lambda r: (0, 0)),
                  pl.BlockSpec((1, c), lambda r: (0, 0))],
        out_specs=pl.BlockSpec((tr, c), lambda r: (r, 0)),
        compiler_params=pltpu.CompilerParams(
            dimension_semantics=("parallel",), vmem_limit_bytes=VMEM_LIMIT),
    )(y2, scale, shift)
    return z2.reshape(n, h, w, c)


@jax.jit
def avgpool3_s2_p1(x):
    """AvgPool2d(kernel=3, stride=2, padding=1, count_include_pad=False) on NHWC (f32)."""
    n, h, w, c = x.shape
    ho = (h - 1) // 2 + 1
    wo = (w - 1) // 2 + 1
    xp = jnp.pad(x, ((0, 0), (1, 1), (1, 1), (0, 0)))
    hp, wp = xp.shape[1], xp.shape[2]
    hp2, wp2 = hp + hp % 2, wp + wp % 2
    if (hp2, wp2) != (hp, wp):
        xp = jnp.pad(xp, ((0, 0), (0, hp2 - hp), (0, wp2 - wp), (0, 0)))
    hs, ws = hp2 // 2, wp2 // 2
    # s2d with the 2x2 phase folded next to the row index: row = h_block*4 + (a*2 + b).
    xs = xp.reshape(n, hs, 2, ws, 2, c).transpose(0, 1, 2, 4, 3, 5).reshape(n, hs * 4, ws, c)

    # count_include_pad=False divisor depends only on the output position (data independent).
    r_idx = jnp.arange(ho)
    c_idx = jnp.arange(wo)
    cnt_h = (3.0 - (r_idx == 0).astype(jnp.float32)
             - (2 * r_idx + 1 > h - 1).astype(jnp.float32))
    cnt_w = (3.0 - (c_idx == 0).astype(jnp.float32)
             - (2 * c_idx + 1 > w - 1).astype(jnp.float32))
    recip = (1.0 / (cnt_h[:, None] * cnt_w[None, :]))[:, :, None]
    recip = jnp.broadcast_to(recip, (ho, wo, c)).astype(jnp.float32)

    out = pl.pallas_call(
        functools.partial(_pool_kernel, ho=ho, wo=wo),
        out_shape=jax.ShapeDtypeStruct((n, ho, wo, c), jnp.float32),
        grid=(n,),
        in_specs=[pl.BlockSpec((None, hs * 4, ws, c), lambda i: (i, 0, 0, 0)),
                  pl.BlockSpec((ho, wo, c), lambda i: (0, 0, 0))],
        out_specs=pl.BlockSpec((None, ho, wo, c), lambda i: (i, 0, 0, 0)),
        compiler_params=pltpu.CompilerParams(
            dimension_semantics=("parallel",), vmem_limit_bytes=VMEM_LIMIT),
    )(xs, recip)
    return out


# ----------------------------------------------------------------------------
# Parameter construction (deterministic, mirrors NLayerDiscriminator.__init__)
# ----------------------------------------------------------------------------
def init_nlayer_params(key, input_nc, ndf, n_layers):
    specs = [dict(cin=input_nc, cout=ndf, stride=2, bn=False, act=True)]
    nf = ndf
    for _ in range(1, n_layers):
        nf_prev, nf = nf, min(nf * 2, 512)
        specs.append(dict(cin=nf_prev, cout=nf, stride=2, bn=True, act=True))
    nf_prev, nf = nf, min(nf * 2, 512)
    specs.append(dict(cin=nf_prev, cout=nf, stride=1, bn=True, act=True))
    specs.append(dict(cin=nf, cout=1, stride=1, bn=False, act=False))

    layers = []
    for li, s in enumerate(specs):
        key, kw_key, kb_key = jax.random.split(key, 3)
        # Only Cout is lane-padded; the raw input keeps its natural channel count.  Padded
        # weight / bias / gamma / beta lanes are exactly zero so padded activations stay zero.
        cinp = s["cin"] if li == 0 else _round_lane(s["cin"])
        coutp = _round_lane(s["cout"])
        w = 0.02 * jax.random.normal(kw_key, (KW, KW, s["cin"], s["cout"]), jnp.float32)
        b = 0.01 * jax.random.normal(kb_key, (s["cout"],), jnp.float32)
        layer = dict(
            w=jnp.zeros((KW, KW, cinp, coutp), jnp.float32)
              .at[:, :, :s["cin"], :s["cout"]].set(w),
            b=jnp.zeros((coutp,), jnp.float32).at[:s["cout"]].set(b),
            stride=s["stride"], bn=s["bn"], act=s["act"], cout=s["cout"],
        )
        if s["bn"]:
            layer["gamma"] = jnp.zeros((coutp,), jnp.float32).at[:s["cout"]].set(1.0)
            layer["beta"] = jnp.zeros((coutp,), jnp.float32)
        layers.append(layer)
    return layers


def nlayer_forward(layers, x):
    """NLayerDiscriminator.forward (getIntermFeat=False)."""
    for layer in layers:
        if layer["bn"]:
            y, ssum, ssq = conv2d(x, layer["w"], layer["b"], layer["stride"], False, True)
            n, ho, wo, _ = y.shape
            x = bn_affine_lrelu(y, ssum, ssq, layer["gamma"], layer["beta"], n * ho * wo)
        else:
            fuse_lrelu = layer["act"]
            x = conv2d(x, layer["w"], layer["b"], layer["stride"], fuse_lrelu, False)
    return x


def multiscale_forward(all_disc_params, x):
    """MultiscaleDiscriminator.forward (getIntermFeat=False): list of [output] per scale."""
    num_d = len(all_disc_params)
    result = []
    x_down = x
    for i in range(num_d):
        params = all_disc_params[num_d - 1 - i]
        out = nlayer_forward(params, x_down)[..., :params[-1]["cout"]]
        result.append([jnp.transpose(out, (0, 3, 1, 2))])   # back to PyTorch NCHW
        if i != num_d - 1:
            x_down = avgpool3_s2_p1(x_down)
    return result


# ----------------------------------------------------------------------------
# Pure-XLA reference (matched bf16 casts) for numerical verification
# ----------------------------------------------------------------------------
def _ref_conv(x, w, b, stride):
    y = lax.conv_general_dilated(
        x.astype(jnp.bfloat16), w.astype(jnp.bfloat16),
        window_strides=(stride, stride),
        padding=((PADW, PADW), (PADW, PADW)),
        dimension_numbers=("NHWC", "HWIO", "NHWC"),
        preferred_element_type=jnp.float32)
    return y + b.reshape(1, 1, 1, -1)


def _ref_bn_lrelu(y, gamma, beta):
    mean = jnp.mean(y, axis=(0, 1, 2), keepdims=True)
    msq = jnp.mean(y * y, axis=(0, 1, 2), keepdims=True)
    var = msq - mean * mean
    scale = gamma.reshape(1, 1, 1, -1) * lax.rsqrt(var + BN_EPS)
    shift = beta.reshape(1, 1, 1, -1) - mean * scale
    z = y * scale + shift
    return jnp.maximum(z, LRELU_SLOPE * z)


def _ref_pool(x):
    pad = ((0, 0), (1, 1), (1, 1), (0, 0))
    s = lax.reduce_window(x, 0.0, lax.add, (1, 3, 3, 1), (1, 2, 2, 1), pad)
    cnt = lax.reduce_window(jnp.ones_like(x), 0.0, lax.add, (1, 3, 3, 1), (1, 2, 2, 1), pad)
    return s / cnt


def _ref_nlayer_forward(layers, x):
    for layer in layers:
        y = _ref_conv(x, layer["w"], layer["b"], layer["stride"])
        if layer["bn"]:
            x = _ref_bn_lrelu(y, layer["gamma"], layer["beta"])
        elif layer["act"]:
            x = jnp.maximum(y, LRELU_SLOPE * y)
        else:
            x = y
    return x


def _ref_multiscale_forward(all_disc_params, x):
    num_d = len(all_disc_params)
    result = []
    x_down = x
    for i in range(num_d):
        params = all_disc_params[num_d - 1 - i]
        out = _ref_nlayer_forward(params, x_down)[..., :params[-1]["cout"]]
        result.append([jnp.transpose(out, (0, 3, 1, 2))])
        if i != num_d - 1:
            x_down = _ref_pool(x_down)
    return result


# ----------------------------------------------------------------------------
if __name__ == "__main__":
    INPUT_NC, NDF, N_LAYERS, NUM_D = 3, 8, 3, 3
    N, H, W = 2, 16, 16

    root = jax.random.PRNGKey(0)
    key_x, key_p = jax.random.split(root)

    # Input in the PyTorch NCHW convention, moved to NHWC (channels stay un-padded).
    x_nchw = jax.random.normal(key_x, (N, INPUT_NC, H, W), jnp.float32)
    x_nhwc = jnp.transpose(x_nchw, (0, 2, 3, 1))

    disc_keys = jax.random.split(key_p, NUM_D)
    all_params = [init_nlayer_params(k, INPUT_NC, NDF, N_LAYERS) for k in disc_keys]

    result = multiscale_forward(all_params, x_nhwc)
    ref_result = _ref_multiscale_forward(all_params, x_nhwc)

    # NCHW output shapes: full-res (2,1,5,5), half (2,1,4,4), quarter (2,1,4,4)
    expected = [(N, 1, 5, 5), (N, 1, 4, 4), (N, 1, 4, 4)]
    for scale_outs, ref_outs, shp in zip(result, ref_result, expected):
        for o, r in zip(scale_outs, ref_outs):
            o = jax.block_until_ready(o)
            assert o.shape == shp, (o.shape, shp)
            assert bool(jnp.all(jnp.isfinite(o)))
            err = float(jnp.max(jnp.abs(o - r)))
            ref_mag = float(jnp.max(jnp.abs(r)))
            assert err <= 2e-2 + 2e-2 * ref_mag, (err, ref_mag)

    print("KERNEL_OK")
</pallas_src>

<mosaic_0001>
module attributes {stable_mosaic.version = 11 : i64} {
  func.func @_conv_kernel(%arg0: i32, %arg1: i32, %arg2: memref<1x90x24xbf16, #tpu.memory_space<vmem>>, %arg3: memref<2x24x128xbf16, #tpu.memory_space<vmem>>, %arg4: memref<1x128xf32, #tpu.memory_space<vmem>>, %arg5: memref<1x81x128xf32, #tpu.memory_space<vmem>>) attributes {dimension_semantics = [#tpu.dimension_semantics<parallel>, #tpu.dimension_semantics<parallel>], iteration_bounds = array<i64: 2, 1>, scalar_prefetch = 0 : i64, scratch_operands = 0 : i64, tpu.core_type = #tpu.core_type<tc>, window_params = [{transform_indices = @transform_0, window_bounds = array<i64: 1, 90, 24>}, {transform_indices = @transform_1, window_bounds = array<i64: 2, 24, 128>}, {transform_indices = @transform_2, window_bounds = array<i64: 1, 128>}, {transform_indices = @transform_3, window_bounds = array<i64: 1, 81, 128>}]} {
    %c0 = arith.constant 0 : index
    %c0_0 = arith.constant 0 : index
    %0 = vector.load %arg4[%c0, %c0_0] : memref<1x128xf32, #tpu.memory_space<vmem>>, vector<1x128xf32>
    %c0_i32 = arith.constant 0 : i32
    %c81_i32 = arith.constant 81 : i32
    %1 = arith.muli %c0_i32, %c81_i32 : i32
    %c0_i32_1 = arith.constant 0 : i32
    %2 = arith.minsi %1, %c0_i32_1 : i32
    %cst = arith.constant 0.000000e+00 : f32
    %3 = vector.broadcast %cst : f32 to vector<81x128xf32>
    %c0_i32_2 = arith.constant 0 : i32
    %4 = arith.addi %2, %c0_i32_2 : i32
    %c0_3 = arith.constant 0 : index
    %5 = arith.index_cast %4 : i32 to index
    %c0_4 = arith.constant 0 : index
    %6 = vector.load %arg2[%c0_3, %5, %c0_4] : memref<1x90x24xbf16, #tpu.memory_space<vmem>>, vector<1x81x24xbf16>
    %7 = vector.shape_cast %6 : vector<1x81x24xbf16> to vector<81x24xbf16>
    %c0_5 = arith.constant 0 : index
    %c0_6 = arith.constant 0 : index
    %c0_7 = arith.constant 0 : index
    %8 = vector.load %arg3[%c0_5, %c0_6, %c0_7] : memref<2x24x128xbf16, #tpu.memory_space<vmem>>, vector<1x24x128xbf16>
    %9 = vector.shape_cast %8 : vector<1x24x128xbf16> to vector<24x128xbf16>
    %cst_8 = arith.constant dense<0.000000e+00> : vector<81x128xf32>
    %10 = tpu.matmul %7, %9, %cst_8 {dimension_numbers = #tpu.dot_dimension_numbers<[1], [0], [0], [1], [0, 0, 1, 1], [], []>} : vector<81x24xbf16>, vector<24x128xbf16>, vector<81x128xf32> -> vector<81x128xf32>
    %11 = arith.addf %3, %10 : vector<81x128xf32>
    %c9_i32 = arith.constant 9 : i32
    %12 = arith.addi %2, %c9_i32 : i32
    %c0_9 = arith.constant 0 : index
    %13 = arith.index_cast %12 : i32 to index
    %c0_10 = arith.constant 0 : index
    %14 = vector.load %arg2[%c0_9, %13, %c0_10] : memref<1x90x24xbf16, #tpu.memory_space<vmem>>, vector<1x81x24xbf16>
    %15 = vector.shape_cast %14 : vector<1x81x24xbf16> to vector<81x24xbf16>
    %c1 = arith.constant 1 : index
    %c0_11 = arith.constant 0 : index
    %c0_12 = arith.constant 0 : index
    %16 = vector.load %arg3[%c1, %c0_11, %c0_12] : memref<2x24x128xbf16, #tpu.memory_space<vmem>>, vector<1x24x128xbf16>
    %17 = vector.shape_cast %16 : vector<1x24x128xbf16> to vector<24x128xbf16>
    %cst_13 = arith.constant dense<0.000000e+00> : vector<81x128xf32>
    %18 = tpu.matmul %15, %17, %cst_13 {dimension_numbers = #tpu.dot_dimension_numbers<[1], [0], [0], [1], [0, 0, 1, 1], [], []>} : vector<81x24xbf16>, vector<24x128xbf16>, vector<81x128xf32> -> vector<81x128xf32>
    %19 = arith.addf %11, %18 : vector<81x128xf32>
    %20 = vector.broadcast %0 : vector<1x128xf32> to vector<81x128xf32>
    %21 = arith.addf %19, %20 : vector<81x128xf32>
    %cst_14 = arith.constant 2.000000e-01 : f32
    %22 = vector.broadcast %cst_14 : f32 to vector<81x128xf32>
    %23 = arith.mulf %22, %21 : vector<81x128xf32>
    %24 = arith.maximumf %21, %23 : vector<81x128xf32>
    %c0_15 = arith.constant 0 : index
    %25 = arith.index_cast %2 : i32 to index
    %c0_16 = arith.constant 0 : index
    %26 = vector.load %arg5[%c0_15, %25, %c0_16] : memref<1x81x128xf32, #tpu.memory_space<vmem>>, vector<1x81x128xf32>
    %27 = vector.shape_cast %26 : vector<1x81x128xf32> to vector<81x128xf32>
    %28 = vector.shape_cast %24 : vector<81x128xf32> to vector<1x81x128xf32>
    tpu.vector_store %arg5[%c0_15, %25, %c0_16], %28 {strides = array<i32>} : memref<1x81x128xf32, #tpu.memory_space<vmem>>, vector<1x81x128xf32>,
    %c1_i32 = arith.constant 1 : i32
    return
  }
  func.func @transform_0(%arg0: i32, %arg1: i32) -> (i32, i32, i32) {
    %c0_i32 = arith.constant 0 : i32
    %c0_i32_0 = arith.constant 0 : i32
    %c0_i32_1 = arith.constant 0 : i32
    return %arg0, %c0_i32, %c0_i32_0 : i32, i32, i32
  }
  func.func @transform_1(%arg0: i32, %arg1: i32) -> (i32, i32, i32) {
    %c0_i32 = arith.constant 0 : i32
    %c0_i32_0 = arith.constant 0 : i32
    %c0_i32_1 = arith.constant 0 : i32
    return %c0_i32, %c0_i32_0, %arg1 : i32, i32, i32
  }
  func.func @transform_2(%arg0: i32, %arg1: i32) -> (i32, i32) {
    %c0_i32 = arith.constant 0 : i32
    %c0_i32_0 = arith.constant 0 : i32
    return %c0_i32, %arg1 : i32, i32
  }
  func.func @transform_3(%arg0: i32, %arg1: i32) -> (i32, i32, i32) {
    %c0_i32 = arith.constant 0 : i32
    %c0_i32_0 = arith.constant 0 : i32
    return %arg0, %c0_i32, %arg1 : i32, i32, i32
  }
}

</mosaic_0001>

<llo_original>
// kernel: conv2d.1
$region0: #{conv2d.1}
  #allocation0 [shape = 'u32[]', space=smem, size = 0x4, offset = 0x4, fixed_abs, tag = 'smem constant byte address 0x4 - core index']
  #allocation1 [shape = 'u32[72,128]{1,0:T(1,128)}', space=vmem, size = 0x9000, scoped, tag = 'internal scratch']
  %s0 = inlined_call_operand.vmem [shape: bf16[2,90,24], index: 0, kind: input, shape index: {}]
  %s1 = inlined_call_operand.vmem [shape: bf16[2,24,128], index: 1, kind: input, shape index: {}]
  %s2 = inlined_call_operand.vmem [shape: f32[1,128], index: 2, kind: input, shape index: {}]
  %s3 = inlined_call_operand.vmem [shape: f32[2,81,128], index: 3, kind: output, shape index: {}]
  %s4 = sld [smem:[#allocation0]]
  $region45: #{conv2d.1} parent=0
    _
  %s6 = ssub.s32 1, %s4
  %s7 = scalar_select 0, %s6, %s4
  loop: start=0, step=1, limit=4
  $region2: #{conv2d.1} parent=0 // loop_pre_header
    _
  $region3: #{conv2d.1} parent=0 // loop_header
    %s9 = sphi 0, %s13
    %p10 = scmp.ge.s32.totalorder %s9, 4
    %s16 = sphi 0, %s28
    %s17 = sphi 0, %s24
    %s18 = sphi 0, %s16
    %s19 = sphi 0, %s17
    %s20 = sphi 0, %s18
    %s21 = sphi 0, %s19
    %s31 = sphi 0, %s33
    %s34 = sphi 0, %s31
    %s35 = sphi 0, %s34
    %s51 = sphi 0, %s35
    %s57 = sphi 0, %s59
    %s60 = sphi 0, %s57
    %s61 = sphi 0, %s60
    %s77 = sphi 0, %s61
    %s83 = sphi 0, %s85
    %s86 = sphi 0, %s83
    %s87 = sphi 0, %s86
    %s103 = sphi 0, %s87
    %s111 = sphi 0, %s113
    %s114 = sphi 0, %s111
    %s115 = sphi 0, %s114
    %s131 = sphi 0, %s115
  $region4: #{conv2d.1} parent=0 // loop_header_branch
    %12 = sbr.rel (%p10) target = $region8
  $region5: #{conv2d.1} parent=0 // loop_body
    %s14 = ssub.s32 %s9, 1
    %s15 = ssub.s32 %s9, 2
    %s22 = sadd.s32 1, %s17
    %p23 = scmp.ge.s32.totalorder %s22, 1
    %s24 = scalar_select %p23, 0, %s22
    %s25 = sadd.s32 1, %s16
    %s26 = scalar_select %p23, %s25, %s16
    %p27 = scmp.ge.s32.totalorder %s26, 2
    %s28 = scalar_select %p27, 0, %s26
    %s29 = ssub.s32 %s16, %s28
    %p30 = scmp.eq.s32.totalorder %s29, 0
    %s32 = sadd.s32 %s31, 1
    %s33 = scalar_select %p30, %s31, %s32
    %p36 = pneg %p30
    %p37 = scmp.eq.s32.totalorder %s9, 1
    %p38 = por %p36, %p37
    %p39 = scmp.ne.s32.totalorder %s31, %s34
    %p40 = scmp.eq.s32.totalorder %s9, 0
    %p41 = por %p39, %p40
    %p42 = scmp.ne.s32.totalorder %s31, %s34
    %p43 = scmp.eq.s32.totalorder %s14, 1
    %p44 = por %p42, %p43
    %p45 = scmp.ne.s32.totalorder %s34, %s35
    %p46 = scmp.eq.s32.totalorder %s14, 0
    %p47 = por %p45, %p46
    %p48 = scmp.ne.s32.totalorder %s34, %s35
    %p49 = scmp.eq.s32.totalorder %s15, 1
    %p50 = por %p48, %p49
    %p52 = scmp.ne.s32.totalorder %s35, %s51
    %p53 = scmp.eq.s32.totalorder %s15, 0
    %p54 = por %p52, %p53
    %s55 = ssub.s32 %s17, %s24
    %p56 = scmp.eq.s32.totalorder %s55, 0
    %s58 = sadd.s32 %s57, 1
    %s59 = scalar_select %p56, %s57, %s58
    %p62 = pneg %p56
    %p63 = scmp.eq.s32.totalorder %s9, 1
    %p64 = por %p62, %p63
    %p65 = scmp.ne.s32.totalorder %s57, %s60
    %p66 = scmp.eq.s32.totalorder %s9, 0
    %p67 = por %p65, %p66
    %p68 = scmp.ne.s32.totalorder %s57, %s60
    %p69 = scmp.eq.s32.totalorder %s14, 1
    %p70 = por %p68, %p69
    %p71 = scmp.ne.s32.totalorder %s60, %s61
    %p72 = scmp.eq.s32.totalorder %s14, 0
    %p73 = por %p71, %p72
    %p74 = scmp.ne.s32.totalorder %s60, %s61
    %p75 = scmp.eq.s32.totalorder %s15, 1
    %p76 = por %p74, %p75
    %p78 = scmp.ne.s32.totalorder %s61, %s77
    %p79 = scmp.eq.s32.totalorder %s15, 0
    %p80 = por %p78, %p79
    %s81 = ssub.s32 %s17, %s24
    %p82 = scmp.eq.s32.totalorder %s81, 0
    %s84 = sadd.s32 %s83, 1
    %s85 = scalar_select %p82, %s83, %s84
    %p88 = pneg %p82
    %p89 = scmp.eq.s32.totalorder %s9, 1
    %p90 = por %p88, %p89
    %p91 = scmp.ne.s32.totalorder %s83, %s86
    %p92 = scmp.eq.s32.totalorder %s9, 0
    %p93 = por %p91, %p92
    %p94 = scmp.ne.s32.totalorder %s83, %s86
    %p95 = scmp.eq.s32.totalorder %s14, 1
    %p96 = por %p94, %p95
    %p97 = scmp.ne.s32.totalorder %s86, %s87
    %p98 = scmp.eq.s32.totalorder %s14, 0
    %p99 = por %p97, %p98
    %p100 = scmp.ne.s32.totalorder %s86, %s87
    %p101 = scmp.eq.s32.totalorder %s15, 1
    %p102 = por %p100, %p101
    %p104 = scmp.ne.s32.totalorder %s87, %s103
    %p105 = scmp.eq.s32.totalorder %s15, 0
    %p106 = por %p104, %p105
    %s107 = ssub.s32 %s16, %s28
    %s108 = ssub.s32 %s17, %s24
    %s109 = sor.u32 %s107, %s108
    %p110 = scmp.eq.s32.totalorder %s109, 0
    %s112 = sadd.s32 %s111, 1
    %s113 = scalar_select %p110, %s111, %s112
    %p116 = pneg %p110
    %p117 = scmp.eq.s32.totalorder %s9, 1
    %p118 = por %p116, %p117
    %p119 = scmp.ne.s32.totalorder %s111, %s114
    %p120 = scmp.eq.s32.totalorder %s9, 0
    %p121 = por %p119, %p120
    %p122 = scmp.ne.s32.totalorder %s111, %s114
    %p123 = scmp.eq.s32.totalorder %s14, 1
    %p124 = por %p122, %p123
    %p125 = scmp.ne.s32.totalorder %s114, %s115
    %p126 = scmp.eq.s32.totalorder %s14, 0
    %p127 = por %p125, %p126
    %p128 = scmp.ne.s32.totalorder %s114, %s115
    %p129 = scmp.eq.s32.totalorder %s15, 1
    %p130 = por %p128, %p129
    %p132 = scmp.ne.s32.totalorder %s115, %s131
    %p133 = scmp.eq.s32.totalorder %s15, 0
    %p134 = por %p132, %p133
    %p135 = scmp.le.s32.totalorder 1, %s9
    %p136 = scmp.lt.s32.totalorder %s9, 3
    %p137 = pnand %p135, %p136
    %p138 = pneg %p137
    // Predicated region
    $region9: #{conv2d.1} parent=5 // pred_check
      _
    $region10: #{conv2d.1} parent=5 // pred_check_branch
      %140 = sbr.rel (%p137) target = $region12
    $region11: #{conv2d.1} parent=5 // pred_region
      %s141 = ssub.s32 %s9, 1
      // Predicated region
      $region13: #{conv2d.1} parent=11 // pred_check
        %p142 = pneg %p73
      $region14: #{conv2d.1} parent=11 // pred_check_branch
        %144 = sbr.rel (%p142) target = $region16
      $region15: #{conv2d.1} parent=11 // pred_region
        %p145 = scmp.lt.s32.totalorder %s19, 0
        %s146 = scalar_select %p145, %s19, 0
        %s147 = smul.addr %s146, 4
        %s148 = scalar_lea.vmem %s1, %s147
      $region16: #{conv2d.1} parent=11 // pred_fallthru
        _
      // Predicated region
      $region17: #{conv2d.1} parent=11 // pred_check
        %p149 = pneg %p99
      $region18: #{conv2d.1} parent=11 // pred_check_branch
        %151 = sbr.rel (%p149) target = $region20
      $region19: #{conv2d.1} parent=11 // pred_region
        %p152 = scmp.lt.s32.totalorder %s19, 0
        %s153 = scalar_select %p152, %s19, 0
        %s154 = scalar_lea.vmem %s2, %s153
      $region20: #{conv2d.1} parent=11 // pred_fallthru
        _
    $region12: #{conv2d.1} parent=5 // pred_fallthru
      _
    %p155 = scmp.lt.s32.totalorder %s9, 2
    // Predicated region
    $region21: #{conv2d.1} parent=5 // pred_check
      %p156 = pneg %p155
    $region22: #{conv2d.1} parent=5 // pred_check_branch
      %158 = sbr.rel (%p156) target = $region24
    $region23: #{conv2d.1} parent=5 // pred_region
      // Predicated region
      $region25: #{conv2d.1} parent=23 // pred_check
        %p159 = pneg %p41
      $region26: #{conv2d.1} parent=23 // pred_check_branch
        %161 = sbr.rel (%p159) target = $region28
      $region27: #{conv2d.1} parent=23 // pred_region
        %p162 = scmp.lt.s32.totalorder %s16, 1
        %s163 = scalar_select %p162, %s16, 1
        %s164 = smul.addr %s163, 12
        %s165 = smul.addr %s164, 4
        %s166 = scalar_lea.vmem %s0, %s165
      $region28: #{conv2d.1} parent=23 // pred_fallthru
        _
    $region24: #{conv2d.1} parent=5 // pred_fallthru
      _
    %p167 = scmp.le.s32.totalorder 1, %s9
    %p168 = scmp.lt.s32.totalorder %s9, 3
    %p169 = pnand %p167, %p168
    %p170 = pneg %p169
    // Predicated region
    $region29: #{conv2d.1} parent=5 // pred_check
      _
    $region30: #{conv2d.1} parent=5 // pred_check_branch
      %172 = sbr.rel (%p169) target = $region32
    $region31: #{conv2d.1} parent=5 // pred_region
      %s173 = ssub.s32 %s9, 1
      %p174 = scmp.lt.s32.totalorder %s18, 1
      %s175 = scalar_select %p174, %s18, 1
      %s176 = smul.addr %s175, 12
      %s177 = smul.addr %s176, 4
      %s178 = scalar_lea.vmem %s0, %s177
      %p179 = pneg %p47
      %p180 = pneg %p44
      %p181 = scmp.lt.s32.totalorder %s19, 0
      %s182 = scalar_select %p181, %s19, 0
      %s183 = smul.addr %s182, 4
      %s184 = scalar_lea.vmem %s1, %s183
      %p185 = pneg %p73
      %p186 = pneg %p70
      %p187 = scmp.lt.s32.totalorder %s19, 0
      %s188 = scalar_select %p187, %s19, 0
      %s189 = scalar_lea.vmem %s2, %s188
      %p190 = pneg %p99
      %p191 = pneg %p96
      %p192 = pneg %p127
      %p193 = pneg %p124
      %p194 = scmp.lt.s32.totalorder %s18, 1
      %s195 = scalar_select %p194, %s18, 1
      %p196 = scmp.lt.s32.totalorder %s19, 0
      %s197 = scalar_select %p196, %s19, 0
      %s198 = smul.addr %s195, 11
      %s199 = sadd.s32 %s197, %s198
      %s200 = smul.addr %s199, 8
      %s201 = scalar_lea.vmem %s3, %s200
      %p202 = scmp.lt.s32.totalorder %s18, 1
      %s203 = scalar_select %p202, %s18, 1
      %s204 = smul.addr %s203, 12
      %s205 = smul.addr %s204, 4
      %s206 = scalar_lea.vmem %s0, %s205
      %p207 = scmp.lt.s32.totalorder %s19, 0
      %s208 = scalar_select %p207, %s19, 0
      %s209 = smul.addr %s208, 4
      %s210 = scalar_lea.vmem %s1, %s209
      %p211 = scmp.lt.s32.totalorder %s19, 0
      %s212 = scalar_select %p211, %s19, 0
      %s213 = scalar_lea.vmem %s2, %s212
      %p214 = scmp.lt.s32.totalorder %s18, 1
      %s215 = scalar_select %p214, %s18, 1
      %p216 = scmp.lt.s32.totalorder %s19, 0
      %s217 = scalar_select %p216, %s19, 0
      %s218 = smul.addr %s215, 11
      %s219 = sadd.s32 %s217, %s218
      %s220 = smul.addr %s219, 8
      %s221 = scalar_lea.vmem %s3, %s220
      %v223 = vld [vmem:[%s213] sm:$0x1]
      %v224 = vld [vmem:[%s206] sm:$0xf]
      %v225 = vld [vmem:[%s206 + $0x4] sm:$0xf]
      %v226 = vld [vmem:[%s206 + $0x8] sm:$0xf]
      %v227 = vld [vmem:[%s206 + $0xc] sm:$0xf]
      %v228 = vld [vmem:[%s206 + $0x10] sm:$0xf]
      %v229 = vld [vmem:[%s206 + $0x14] sm:$0xf]
      %v230 = vld [vmem:[%s206 + $0x18] sm:$0xf]
      %v231 = vld [vmem:[%s206 + $0x1c] sm:$0xf]
      %v232 = vld [vmem:[%s206 + $0x20] sm:$0xf]
      %v233 = vld [vmem:[%s206 + $0x24] sm:$0xf]
      %v234 = vld [vmem:[%s206 + $0x28] sm:$0x1]
      %v235 = vld [vmem:[%s210] sm:$0xf]
      %v236 = vld [vmem:[%s210 + $0x4] sm:$0xf]
      %v237 = vld [vmem:[%s210 + $0x8] sm:$0xf]
      %v238 = vld [vmem:[%s206 + $0x28] sm:$0xf]
      %v239 = vld [vmem:[%s206 + $0x2c] sm:$0x1]
      %s240 = scalar_lea.vmem %s210, 12
      %v241 = vld [vmem:[%s240] sm:$0xf]
      %v242 = vld [vmem:[%s240 + $0x4] sm:$0xf]
      %v243 = vld [vmem:[%s240 + $0x8] sm:$0xf]
      %v255 = vunpack.c.l.b16 %v225
      %v256 = vunpack.c.l.b16 %v226
      %v257 = vunpack.c.l.b16 %v227
      %v258 = vunpack.c.l.b16 %v228
      %v259 = vunpack.c.l.b16 %v229
      %v260 = vunpack.c.l.b16 %v230
      %v261 = vunpack.c.l.b16 %v231
      %v262 = vunpack.c.l.b16 %v232
      %v263 = vunpack.c.l.b16 %v233
      %v264 = vunpack.c.l.b16 %v238
      %v265 = vunpack.c.l.b16 %v239
      %v266 = vpack.c.b16 %v256, %v255
      %v267 = vpack.c.b16 %v258, %v257
      %v268 = vpack.c.b16 %v260, %v259
      %v269 = vpack.c.b16 %v262, %v261
      %v270 = vpack.c.b16 %v264, %v263
      %v271 = vpack.c.b16 %v265, %v265
      %vm272 = vsmask.f32 7424
      %v274 = vshrl.u32 %v266, 16
      %v276 = vshll.u32 %v266, 16
      %v278 = vrot.slane %v276, 1
      %v279 = vor.u32 %v274, %v278
      %v281 = vshll.u32 %v267, 16
      %v283 = vrot.slane %v281, 1
      %v284 = vsel %vm272, %v279, %v283
      %v285 = vshrl.u32 %v267, 16
      %v287 = vor.u32 %v285, %v283
      %v289 = vshll.u32 %v268, 16
      %v291 = vrot.slane %v289, 1
      %v292 = vsel %vm272, %v287, %v291
      %v293 = vshrl.u32 %v268, 16
      %v295 = vor.u32 %v293, %v291
      %v297 = vshll.u32 %v269, 16
      %v299 = vrot.slane %v297, 1
      %v300 = vsel %vm272, %v295, %v299
      %v301 = vshrl.u32 %v269, 16
      %v303 = vor.u32 %v301, %v299
      %v305 = vshll.u32 %v270, 16
      %v307 = vrot.slane %v305, 1
      %v308 = vsel %vm272, %v303, %v307
      %v309 = vshrl.u32 %v270, 16
      %v311 = vor.u32 %v309, %v307
      %v313 = vshll.u32 %v271, 16
      %v315 = vrot.slane %v313, 1
      %v316 = vsel %vm272, %v311, %v315
      %v317 = vshrl.u32 %v271, 16
      %v322 = vunpack.c.l.b16 %v241
      %v323 = vunpack.c.l.b16 %v242
      %v324 = vunpack.c.l.b16 %v243
      %v325 = vpack.c.b16 %v323, %v322
      %v326 = vpack.c.b16 %v324, %v324
      %vm328 = vcmask 195584
      %v330 = vsel %vm328, %v284, 0
      %v333 = vsel %vm328, %v292, 0
      %v336 = vsel %vm328, %v300, 0
      %v339 = vsel %vm328, %v308, 0
      %v342 = vsel %vm328, %v316, 0
      %v345 = vsel %vm328, %v317, 0
      %vm347 = vcmask 1043456
      %v349 = vsel %vm347, %v326, 0
      %351 = vmatpush.bf16.msra.mxu0 0
      %352 = vmatpush.bf16.msra.mxu0 0
      %353 = vmatpush.bf16.msra.mxu0 0
      %354 = vmatpush.bf16.msra.mxu0 0
      %355 = vmatpush.bf16.msra.mxu0 0
      %356 = vmatpush.bf16.msra.mxu0 0
      %357 = vmatpush.bf16.msra.mxu0 %v349
      %358 = vmatpush.bf16.msra.mxu0 %v325
      %359 = vmatmul.bf16.gmra.mxu0 %v330
      %v360 = vpop.f32.mrf.mxu0
      %v361 = vadd.f32 0.0, %v360
      %v362 = vpop.f32.mrf.mxu0
      %v363 = vadd.f32 0.0, %v362
      %364 = vmatmul.bf16.gmra.mxu0 %v333
      %v365 = vpop.f32.mrf.mxu0
      %v366 = vadd.f32 0.0, %v365
      %v367 = vpop.f32.mrf.mxu0
      %v368 = vadd.f32 0.0, %v367
      %369 = vmatmul.bf16.gmra.mxu0 %v336
      %v370 = vpop.f32.mrf.mxu0
      %v371 = vadd.f32 0.0, %v370
      %v372 = vpop.f32.mrf.mxu0
      %v373 = vadd.f32 0.0, %v372
      %374 = vmatmul.bf16.gmra.mxu0 %v339
      %v375 = vpop.f32.mrf.mxu0
      %v376 = vadd.f32 0.0, %v375
      %v377 = vpop.f32.mrf.mxu0
      %v378 = vadd.f32 0.0, %v377
      %379 = vmatmul.bf16.gmra.mxu0 %v342
      %v380 = vpop.f32.mrf.mxu0
      %v381 = vadd.f32 0.0, %v380
      %v382 = vpop.f32.mrf.mxu0
      %v383 = vadd.f32 0.0, %v382
      %384 = vmatmul.bf16.gmra.mxu0 %v345
      %v385 = vpop.f32.mrf.mxu0
      %v386 = vadd.f32 0.0, %v385
      %v387 = vpop.f32.mrf.mxu0
      %388 = vdwg.mxu0
      %v391 = vunpack.c.l.b16 %v224
      %v392 = vunpack.c.l.b16 %v234
      %v393 = vpack.c.b16 %v255, %v391
      %v394 = vpack.c.b16 %v257, %v256
      %v395 = vpack.c.b16 %v259, %v258
      %v396 = vpack.c.b16 %v261, %v260
      %v397 = vpack.c.b16 %v263, %v262
      %v398 = vpack.c.b16 %v392, %v392
      %v402 = vunpack.c.l.b16 %v235
      %v403 = vunpack.c.l.b16 %v236
      %v404 = vunpack.c.l.b16 %v237
      %v405 = vpack.c.b16 %v403, %v402
      %v406 = vpack.c.b16 %v404, %v404
      %v409 = vsel %vm328, %v393, 0
      %v412 = vsel %vm328, %v394, 0
      %v415 = vsel %vm328, %v395, 0
      %v418 = vsel %vm328, %v396, 0
      %v421 = vsel %vm328, %v397, 0
      %v424 = vsel %vm328, %v398, 0
      %v427 = vsel %vm347, %v406, 0
      %429 = vmatpush.bf16.msra.mxu0 0
      %430 = vmatpush.bf16.msra.mxu0 0
      %431 = vmatpush.bf16.msra.mxu0 0
      %432 = vmatpush.bf16.msra.mxu0 0
      %433 = vmatpush.bf16.msra.mxu0 0
      %434 = vmatpush.bf16.msra.mxu0 0
      %435 = vmatpush.bf16.msra.mxu0 %v427
      %436 = vmatpush.bf16.msra.mxu0 %v405
      %437 = vmatmul.bf16.gmra.mxu0 %v409
      %v438 = vpop.f32.mrf.mxu0
      %v439 = vadd.f32 %v361, %v438
      %v440 = vpop.f32.mrf.mxu0
      %v441 = vadd.f32 %v363, %v440
      %442 = vmatmul.bf16.gmra.mxu0 %v412
      %v443 = vpop.f32.mrf.mxu0
      %v444 = vadd.f32 %v366, %v443
      %v445 = vpop.f32.mrf.mxu0
      %v446 = vadd.f32 %v368, %v445
      %447 = vmatmul.bf16.gmra.mxu0 %v415
      %v448 = vpop.f32.mrf.mxu0
      %v449 = vadd.f32 %v371, %v448
      %v450 = vpop.f32.mrf.mxu0
      %v451 = vadd.f32 %v373, %v450
      %452 = vmatmul.bf16.gmra.mxu0 %v418
      %v453 = vpop.f32.mrf.mxu0
      %v454 = vadd.f32 %v376, %v453
      %v455 = vpop.f32.mrf.mxu0
      %v456 = vadd.f32 %v378, %v455
      %457 = vmatmul.bf16.gmra.mxu0 %v421
      %v458 = vpop.f32.mrf.mxu0
      %v459 = vadd.f32 %v381, %v458
      %v460 = vpop.f32.mrf.mxu0
      %v461 = vadd.f32 %v383, %v460
      %462 = vmatmul.bf16.gmra.mxu0 %v424
      %v463 = vpop.f32.mrf.mxu0
      %v464 = vadd.f32 %v386, %v463
      %v465 = vpop.f32.mrf.mxu0
      %466 = vdwg.mxu0
      %v468 = vperm.slane %v223, 0
      %v470 = vadd.f32 %v439, %v468
      %v471 = vadd.f32 %v441, %v468
      %v472 = vadd.f32 %v444, %v468
      %v473 = vadd.f32 %v446, %v468
      %v474 = vadd.f32 %v449, %v468
      %v475 = vadd.f32 %v451, %v468
      %v476 = vadd.f32 %v454, %v468
      %v477 = vadd.f32 %v456, %v468
      %v478 = vadd.f32 %v459, %v468
      %v479 = vadd.f32 %v461, %v468
      %v480 = vadd.f32 %v464, %v468
      %v481 = vmul.f32 %v470, 0.2
      %v482 = vmul.f32 %v471, 0.2
      %v483 = vmul.f32 %v472, 0.2
      %v484 = vmul.f32 %v473, 0.2
      %v485 = vmul.f32 %v474, 0.2
      %v486 = vmul.f32 %v475, 0.2
      %v487 = vmul.f32 %v476, 0.2
      %v488 = vmul.f32 %v477, 0.2
      %v489 = vmul.f32 %v478, 0.2
      %v490 = vmul.f32 %v479, 0.2
      %v491 = vmul.f32 %v480, 0.2
      %v492 = vmax.f32 %v470, %v481
      %v493 = vmax.f32 %v471, %v482
      %v494 = vmax.f32 %v472, %v483
      %v495 = vmax.f32 %v473, %v484
      %v496 = vmax.f32 %v474, %v485
      %v497 = vmax.f32 %v475, %v486
      %v498 = vmax.f32 %v476, %v487
      %v499 = vmax.f32 %v477, %v488
      %v500 = vmax.f32 %v478, %v489
      %v501 = vmax.f32 %v479, %v490
      %v502 = vmax.f32 %v480, %v491
      %503 = vst [vmem:[%s221] sm:$0xff] %v492
      %504 = vst [vmem:[%s221 + $0x8] sm:$0xff] %v493
      %505 = vst [vmem:[%s221 + $0x10] sm:$0xff] %v494
      %506 = vst [vmem:[%s221 + $0x18] sm:$0xff] %v495
      %507 = vst [vmem:[%s221 + $0x20] sm:$0xff] %v496
      %508 = vst [vmem:[%s221 + $0x28] sm:$0xff] %v497
      %509 = vst [vmem:[%s221 + $0x30] sm:$0xff] %v498
      %510 = vst [vmem:[%s221 + $0x38] sm:$0xff] %v499
      %511 = vst [vmem:[%s221 + $0x40] sm:$0xff] %v500
      %512 = vst [vmem:[%s221 + $0x48] sm:$0xff] %v501
      %513 = vst [vmem:[%s221 + $0x50] sm:$0x1] %v502
      %p514 = scmp.lt.s32.totalorder %s18, 1
      %s515 = scalar_select %p514, %s18, 1
      %p516 = scmp.lt.s32.totalorder %s19, 0
      %s517 = scalar_select %p516, %s19, 0
      %s518 = smul.addr %s515, 11
      %s519 = sadd.s32 %s517, %s518
      %s520 = smul.addr %s519, 8
      %s521 = scalar_lea.vmem %s3, %s520
      // Predicated region
      $region33: #{conv2d.1} parent=31 // pred_check
        %p522 = pneg %p124
      $region34: #{conv2d.1} parent=31 // pred_check_branch
        %524 = sbr.rel (%p522) target = $region36
      $region35: #{conv2d.1} parent=31 // pred_region
        _
      $region36: #{conv2d.1} parent=31 // pred_fallthru
        _
    $region32: #{conv2d.1} parent=5 // pred_fallthru
      _
    %p525 = scmp.le.s32.totalorder 2, %s9
    // Predicated region
    $region37: #{conv2d.1} parent=5 // pred_check
      %p526 = pneg %p525
    $region38: #{conv2d.1} parent=5 // pred_check_branch
      %528 = sbr.rel (%p526) target = $region40
    $region39: #{conv2d.1} parent=5 // pred_region
      %s529 = ssub.s32 %s9, 2
      // Predicated region
      $region41: #{conv2d.1} parent=39 // pred_check
        %p530 = pneg %p130
      $region42: #{conv2d.1} parent=39 // pred_check_branch
        %532 = sbr.rel (%p530) target = $region44
      $region43: #{conv2d.1} parent=39 // pred_region
        %p533 = scmp.lt.s32.totalorder %s20, 1
        %s534 = scalar_select %p533, %s20, 1
        %p535 = scmp.lt.s32.totalorder %s21, 0
        %s536 = scalar_select %p535, %s21, 0
        %s537 = smul.addr %s534, 11
        %s538 = sadd.s32 %s536, %s537
        %s539 = smul.addr %s538, 8
        %s540 = scalar_lea.vmem %s3, %s539
      $region44: #{conv2d.1} parent=39 // pred_fallthru
        _
    $region40: #{conv2d.1} parent=5 // pred_fallthru
      _
  $region6: #{conv2d.1} parent=0 // loop_footer
    %s13 = sadd.s32 1, %s9
  $region7: #{conv2d.1} parent=0 // loop_footer_branch
    %8 = sbr.rel target = $region3
  $region8: #{conv2d.1} parent=0 // loop_exit
    _

</llo_original>
